<compile_context>
chip_gen: v5e
topology: v5e:2x2
jax: 0.10.0
libtpu: 0.0.40
codegen_flags: <defaults>
</compile_context>

<pallas_src>
import functools

import jax
import jax.numpy as jnp
from jax.experimental import pallas as pl
from jax.experimental.pallas import tpu as pltpu

IN_DIM, H1, H2, OUT_DIM = 178, 64, 16, 5


def _round_up(n, m):
    return (n + m - 1) // m * m


def mlp_kernel(x_ref, w1_ref, w2_ref, w3_ref, bias_ref, o_ref):
    # x_ref:    (TB, 178) f32   streamed per grid step (unpadded)
    # w1_ref:   (178, 64) bf16  VMEM-resident (constant index_map)
    # w2_ref:   (64, 16)  bf16  VMEM-resident
    # w3_ref:   (16, 5)   bf16  VMEM-resident
    # bias_ref: (3, 64)   f32   row0 = b1, row1[:16] = b2, row2[:5] = b3
    # o_ref:    (TB, 5)   f32   tight output block (masked vst; kernel is DMA-bound)
    b1 = bias_ref[0:1, :H1]
    b2 = bias_ref[1:2, :H2]
    b3 = bias_ref[2:3, :OUT_DIM]

    # bf16 cast on the VPU (free) instead of paying HBM bytes for a wrapper cast/pad.
    x = x_ref[...].astype(jnp.bfloat16)

    # Layer 1: (TB,178) @ (178,64) -> f32 accumulate; Mosaic pads K=178 in VMEM.
    h1 = jnp.dot(x, w1_ref[...], preferred_element_type=jnp.float32)
    h1 = jnp.maximum(h1 + b1, 0.0)

    # Layer 2: (TB,64) @ (64,16)
    h2 = jnp.dot(h1.astype(jnp.bfloat16), w2_ref[...],
                 preferred_element_type=jnp.float32)
    h2 = jnp.maximum(h2 + b2, 0.0)

    # Output layer: (TB,16) @ (16,5), no activation.
    out = jnp.dot(h2.astype(jnp.bfloat16), w3_ref[...],
                  preferred_element_type=jnp.float32)
    o_ref[...] = out + b3


def prepare_kernel_params(params):
    """Pack / cast the f32 (in, out)-layout params into the kernel's resident layout."""
    bias = jnp.zeros((3, H1), jnp.float32)
    bias = bias.at[0, :H1].set(params["b1"].reshape(-1))
    bias = bias.at[1, :H2].set(params["b2"].reshape(-1))
    bias = bias.at[2, :OUT_DIM].set(params["b3"].reshape(-1))
    return {
        "w1": params["w1"].astype(jnp.bfloat16),   # (178, 64)
        "w2": params["w2"].astype(jnp.bfloat16),   # (64, 16)
        "w3": params["w3"].astype(jnp.bfloat16),   # (16, 5)
        "bias": bias,                              # (3, 64) f32
    }


@functools.partial(jax.jit, static_argnames=("tb",))
def my_mlp_forward(x, kparams, *, tb=2048):
    """x: (B, 178) float32. kparams: output of prepare_kernel_params. Returns (B, 5) f32."""
    B = x.shape[0]
    # Batch tile: multiple of 16 (bf16 sublane packing), capped so the double-buffered
    # working set stays well inside VMEM, and small enough that the grid has >= 2 steps
    # whenever B > 16 (keeps both v7x TensorCores busy; no-op on v5e/v6e).
    TB = max(16, min(tb, 4096, _round_up((B + 1) // 2, 16)))
    grid = (pl.cdiv(B, TB),)

    w1, w2, w3, bias = kparams["w1"], kparams["w2"], kparams["w3"], kparams["bias"]

    # VMEM budget: double-buffered x/out tiles + resident weights/biases + intermediates.
    resident = (IN_DIM * H1 + H1 * H2 + H2 * OUT_DIM) * 2 + 3 * H1 * 4
    vmem_bytes = (2 * TB * IN_DIM * x.dtype.itemsize     # x tiles (streamed)
                  + 2 * TB * OUT_DIM * 4                 # out tiles (f32)
                  + 2 * resident                         # bf16 weights + packed biases
                  + TB * 2048)                           # in-kernel x/h1/h2 values
    vmem_limit = int(min(max(2 * vmem_bytes, 8 << 20), 48 << 20))

    return pl.pallas_call(
        mlp_kernel,
        out_shape=jax.ShapeDtypeStruct((B, OUT_DIM), jnp.float32),
        grid=grid,
        in_specs=[
            pl.BlockSpec((TB, IN_DIM), lambda i: (i, 0)),    # x: streamed, unpadded
            pl.BlockSpec((IN_DIM, H1), lambda i: (0, 0)),    # weights: DMA'd once,
            pl.BlockSpec((H1, H2), lambda i: (0, 0)),        #   resident across grid
            pl.BlockSpec((H2, OUT_DIM), lambda i: (0, 0)),
            pl.BlockSpec((3, H1), lambda i: (0, 0)),         # packed biases: one DMA
        ],
        out_specs=pl.BlockSpec((TB, OUT_DIM), lambda i: (i, 0)),
        compiler_params=pltpu.CompilerParams(
            dimension_semantics=("parallel",),
            vmem_limit_bytes=vmem_limit,
        ),
    )(x, w1, w2, w3, bias)


def init_params(key):
    """Deterministic init mimicking PyTorch nn.Linear default (U[-1/sqrt(fan_in), +])."""
    def linear(key, fan_in, fan_out):
        kw, kb = jax.random.split(key)
        bound = 1.0 / jnp.sqrt(fan_in)
        # Stored already transposed to (in, out): kernel computes y = x @ W + b.
        w = jax.random.uniform(kw, (fan_in, fan_out), jnp.float32, -bound, bound)
        b = jax.random.uniform(kb, (1, fan_out), jnp.float32, -bound, bound)
        return w, b

    k1, k2, k3 = jax.random.split(key, 3)
    w1, b1 = linear(k1, IN_DIM, H1)
    w2, b2 = linear(k2, H1, H2)
    w3, b3 = linear(k3, H2, OUT_DIM)
    return {"w1": w1, "b1": b1, "w2": w2, "b2": b2, "w3": w3, "b3": b3}


def reference_forward(x, params):
    """Full-f32 reference matching the original PyTorch module semantics."""
    h1 = jnp.maximum(x @ params["w1"] + params["b1"], 0.0)
    h2 = jnp.maximum(h1 @ params["w2"] + params["b2"], 0.0)
    return h2 @ params["w3"] + params["b3"]


if __name__ == "__main__":
    key = jax.random.PRNGKey(0)
    kx, kp = jax.random.split(key)

    # batch=20 with the default tb -> TB=16, a 2-step grid, and a ragged last tile
    # (rows 16..19 valid, OOB rows clipped), exercising the unpadded streaming path.
    batch = 20
    x = jax.random.normal(kx, (batch, IN_DIM), jnp.float32)
    params = init_params(kp)
    kparams = prepare_kernel_params(params)

    out = my_mlp_forward(x, kparams)
    out = jax.block_until_ready(out)

    ref = reference_forward(x, params)
    assert out.shape == (batch, OUT_DIM)
    # bf16 MXU inputs with f32 accumulation -> compare against the f32 reference loosely.
    assert jnp.allclose(out, ref, atol=3e-2, rtol=3e-2), "mismatch vs JAX reference"

    print("KERNEL_OK")
</pallas_src>

<mosaic_0001>
module attributes {stable_mosaic.version = 11 : i64} {
  func.func @mlp_kernel(%arg0: i32, %arg1: memref<16x178xf32, #tpu.memory_space<vmem>>, %arg2: memref<178x64xbf16, #tpu.memory_space<vmem>>, %arg3: memref<64x16xbf16, #tpu.memory_space<vmem>>, %arg4: memref<16x5xbf16, #tpu.memory_space<vmem>>, %arg5: memref<3x64xf32, #tpu.memory_space<vmem>>, %arg6: memref<16x5xf32, #tpu.memory_space<vmem>>) attributes {dimension_semantics = [#tpu.dimension_semantics<parallel>], iteration_bounds = array<i64: 2>, scalar_prefetch = 0 : i64, scratch_operands = 0 : i64, tpu.core_type = #tpu.core_type<tc>, window_params = [{transform_indices = @transform_0, window_bounds = array<i64: 16, 178>}, {pipeline_mode = #tpu.pipeline_mode<synchronous>, transform_indices = @transform_1, window_bounds = array<i64: 178, 64>}, {pipeline_mode = #tpu.pipeline_mode<synchronous>, transform_indices = @transform_2, window_bounds = array<i64: 64, 16>}, {pipeline_mode = #tpu.pipeline_mode<synchronous>, transform_indices = @transform_3, window_bounds = array<i64: 16, 5>}, {pipeline_mode = #tpu.pipeline_mode<synchronous>, transform_indices = @transform_4, window_bounds = array<i64: 3, 64>}, {transform_indices = @transform_5, window_bounds = array<i64: 16, 5>}]} {
    %c0 = arith.constant 0 : index
    %c0_0 = arith.constant 0 : index
    %0 = vector.load %arg5[%c0, %c0_0] : memref<3x64xf32, #tpu.memory_space<vmem>>, vector<1x64xf32>
    %c1 = arith.constant 1 : index
    %c0_1 = arith.constant 0 : index
    %1 = vector.load %arg5[%c1, %c0_1] : memref<3x64xf32, #tpu.memory_space<vmem>>, vector<1x16xf32>
    %c2 = arith.constant 2 : index
    %c0_2 = arith.constant 0 : index
    %2 = vector.load %arg5[%c2, %c0_2] : memref<3x64xf32, #tpu.memory_space<vmem>>, vector<1x5xf32>
    %c0_3 = arith.constant 0 : index
    %c0_4 = arith.constant 0 : index
    %3 = vector.load %arg1[%c0_3, %c0_4] : memref<16x178xf32, #tpu.memory_space<vmem>>, vector<16x178xf32>
    %4 = arith.truncf %3 : vector<16x178xf32> to vector<16x178xbf16>
    %c0_5 = arith.constant 0 : index
    %c0_6 = arith.constant 0 : index
    %5 = vector.load %arg2[%c0_5, %c0_6] : memref<178x64xbf16, #tpu.memory_space<vmem>>, vector<178x64xbf16>
    %cst = arith.constant dense<0.000000e+00> : vector<16x64xf32>
    %6 = tpu.matmul %4, %5, %cst {dimension_numbers = #tpu.dot_dimension_numbers<[1], [0], [0], [1], [0, 0, 1, 1], [], []>} : vector<16x178xbf16>, vector<178x64xbf16>, vector<16x64xf32> -> vector<16x64xf32>
    %7 = vector.broadcast %0 : vector<1x64xf32> to vector<16x64xf32>
    %8 = arith.addf %6, %7 : vector<16x64xf32>
    %cst_7 = arith.constant 0.000000e+00 : f32
    %9 = vector.broadcast %cst_7 : f32 to vector<16x64xf32>
    %10 = arith.maximumf %8, %9 : vector<16x64xf32>
    %11 = arith.truncf %10 : vector<16x64xf32> to vector<16x64xbf16>
    %c0_8 = arith.constant 0 : index
    %c0_9 = arith.constant 0 : index
    %12 = vector.load %arg3[%c0_8, %c0_9] : memref<64x16xbf16, #tpu.memory_space<vmem>>, vector<64x16xbf16>
    %cst_10 = arith.constant dense<0.000000e+00> : vector<16x16xf32>
    %13 = tpu.matmul %11, %12, %cst_10 {dimension_numbers = #tpu.dot_dimension_numbers<[1], [0], [0], [1], [0, 0, 1, 1], [], []>} : vector<16x64xbf16>, vector<64x16xbf16>, vector<16x16xf32> -> vector<16x16xf32>
    %14 = vector.broadcast %1 : vector<1x16xf32> to vector<16x16xf32>
    %15 = arith.addf %13, %14 : vector<16x16xf32>
    %cst_11 = arith.constant 0.000000e+00 : f32
    %16 = vector.broadcast %cst_11 : f32 to vector<16x16xf32>
    %17 = arith.maximumf %15, %16 : vector<16x16xf32>
    %18 = arith.truncf %17 : vector<16x16xf32> to vector<16x16xbf16>
    %c0_12 = arith.constant 0 : index
    %c0_13 = arith.constant 0 : index
    %19 = vector.load %arg4[%c0_12, %c0_13] : memref<16x5xbf16, #tpu.memory_space<vmem>>, vector<16x5xbf16>
    %cst_14 = arith.constant dense<0.000000e+00> : vector<16x5xf32>
    %20 = tpu.matmul %18, %19, %cst_14 {dimension_numbers = #tpu.dot_dimension_numbers<[1], [0], [0], [1], [0, 0, 1, 1], [], []>} : vector<16x16xbf16>, vector<16x5xbf16>, vector<16x5xf32> -> vector<16x5xf32>
    %21 = vector.broadcast %2 : vector<1x5xf32> to vector<16x5xf32>
    %22 = arith.addf %20, %21 : vector<16x5xf32>
    %c0_15 = arith.constant 0 : index
    %c0_16 = arith.constant 0 : index
    %23 = vector.load %arg6[%c0_15, %c0_16] : memref<16x5xf32, #tpu.memory_space<vmem>>, vector<16x5xf32>
    tpu.vector_store %arg6[%c0_15, %c0_16], %22 {strides = array<i32>} : memref<16x5xf32, #tpu.memory_space<vmem>>, vector<16x5xf32>,
    return
  }
  func.func @transform_0(%arg0: i32) -> (i32, i32) {
    %c0_i32 = arith.constant 0 : i32
    %c0_i32_0 = arith.constant 0 : i32
    return %arg0, %c0_i32 : i32, i32
  }
  func.func @transform_1(%arg0: i32) -> (i32, i32) {
    %c0_i32 = arith.constant 0 : i32
    %c0_i32_0 = arith.constant 0 : i32
    %c0_i32_1 = arith.constant 0 : i32
    return %c0_i32, %c0_i32_0 : i32, i32
  }
  func.func @transform_2(%arg0: i32) -> (i32, i32) {
    %c0_i32 = arith.constant 0 : i32
    %c0_i32_0 = arith.constant 0 : i32
    %c0_i32_1 = arith.constant 0 : i32
    return %c0_i32, %c0_i32_0 : i32, i32
  }
  func.func @transform_3(%arg0: i32) -> (i32, i32) {
    %c0_i32 = arith.constant 0 : i32
    %c0_i32_0 = arith.constant 0 : i32
    %c0_i32_1 = arith.constant 0 : i32
    return %c0_i32, %c0_i32_0 : i32, i32
  }
  func.func @transform_4(%arg0: i32) -> (i32, i32) {
    %c0_i32 = arith.constant 0 : i32
    %c0_i32_0 = arith.constant 0 : i32
    %c0_i32_1 = arith.constant 0 : i32
    return %c0_i32, %c0_i32_0 : i32, i32
  }
  func.func @transform_5(%arg0: i32) -> (i32, i32) {
    %c0_i32 = arith.constant 0 : i32
    %c0_i32_0 = arith.constant 0 : i32
    return %arg0, %c0_i32 : i32, i32
  }
}

</mosaic_0001>

<llo_original>
// kernel: my_mlp_forward.1
$region0: #{my_mlp_forward.1}
  #allocation0 [shape = 'u32[]', space=smem, size = 0x4, offset = 0x4, fixed_abs, tag = 'smem constant byte address 0x4 - core index']
  #allocation1 [shape = 'u32[72,128]{1,0:T(1,128)}', space=vmem, size = 0x9000, scoped, tag = 'internal scratch']
  %s0 = inlined_call_operand.vmem [shape: f32[20,178], index: 0, kind: input, shape index: {}]
  %s1 = inlined_call_operand.vmem [shape: bf16[178,64], index: 1, kind: input, shape index: {}]
  %s2 = inlined_call_operand.vmem [shape: bf16[64,16], index: 2, kind: input, shape index: {}]
  %s3 = inlined_call_operand.vmem [shape: bf16[16,5], index: 3, kind: input, shape index: {}]
  %s4 = inlined_call_operand.vmem [shape: f32[3,64], index: 4, kind: input, shape index: {}]
  %s5 = inlined_call_operand.vmem [shape: f32[20,5], index: 5, kind: output, shape index: {}]
  %s6 = sld [smem:[#allocation0]]
  $region101: #{my_mlp_forward.1} parent=0
    _
  %s8 = ssub.s32 1, %s6
  %s9 = scalar_select 0, %s8, %s6
  $region1: #{my_mlp_forward.1} parent=0
    #allocation2 [shape = 'u8[16384]{0}', space=vmem, size = 0x4000, scoped, tag = 'output window, operand 0']
    loop: start=0, step=1, limit=4
    $region2: #{my_mlp_forward.1} parent=1 // loop_pre_header
      _
    $region3: #{my_mlp_forward.1} parent=1 // loop_header
      %s11 = sphi 0, %s15
      %p12 = scmp.ge.s32.totalorder %s11, 4
      %s21 = sphi 0, %s23
      %s24 = sphi 0, %s21
      %s25 = sphi 0, %s24
      %s41 = sphi 0, %s25
      %s45 = sphi 0, %s45
      %s47 = sphi 0, %s45
      %s48 = sphi 0, %s47
      %s62 = sphi 0, %s48
      %s66 = sphi 0, %s66
      %s68 = sphi 0, %s66
      %s69 = sphi 0, %s68
      %s83 = sphi 0, %s69
      %s87 = sphi 0, %s87
      %s89 = sphi 0, %s87
      %s90 = sphi 0, %s89
      %s104 = sphi 0, %s90
      %s108 = sphi 0, %s108
      %s110 = sphi 0, %s108
      %s111 = sphi 0, %s110
      %s125 = sphi 0, %s111
      %s131 = sphi 0, %s133
      %s134 = sphi 0, %s131
      %s135 = sphi 0, %s134
      %s151 = sphi 0, %s135
    $region4: #{my_mlp_forward.1} parent=1 // loop_header_branch
      %14 = sbr.rel (%p12) target = $region8
    $region5: #{my_mlp_forward.1} parent=1 // loop_body
      %s16 = ssub.s32 %s11, 1
      %s17 = ssub.s32 %s11, 2
      %s18 = sadd.s32 %s11, 1
      %s19 = ssub.s32 %s11, %s18
      %p20 = scmp.eq.s32.totalorder %s19, 0
      %s22 = sadd.s32 %s21, 1
      %s23 = scalar_select %p20, %s21, %s22
      %p26 = pneg %p20
      %p27 = scmp.eq.s32.totalorder %s11, 1
      %p28 = por %p26, %p27
      %p29 = scmp.ne.s32.totalorder %s21, %s24
      %p30 = scmp.eq.s32.totalorder %s11, 0
      %p31 = por %p29, %p30
      %p32 = scmp.ne.s32.totalorder %s21, %s24
      %p33 = scmp.eq.s32.totalorder %s16, 1
      %p34 = por %p32, %p33
      %p35 = scmp.ne.s32.totalorder %s24, %s25
      %p36 = scmp.eq.s32.totalorder %s16, 0
      %p37 = por %p35, %p36
      %p38 = scmp.ne.s32.totalorder %s24, %s25
      %p39 = scmp.eq.s32.totalorder %s17, 1
      %p40 = por %p38, %p39
      %p42 = scmp.ne.s32.totalorder %s25, %s41
      %p43 = scmp.eq.s32.totalorder %s17, 0
      %p44 = por %p42, %p43
      %s46 = sadd.s32 %s45, 1
      %p49 = scmp.eq.s32.totalorder %s11, 1
      %p50 = scmp.ne.s32.totalorder %s45, %s47
      %p51 = scmp.eq.s32.totalorder %s11, 0
      %p52 = por %p50, %p51
      %p53 = scmp.ne.s32.totalorder %s45, %s47
      %p54 = scmp.eq.s32.totalorder %s16, 1
      %p55 = por %p53, %p54
      %p56 = scmp.ne.s32.totalorder %s47, %s48
      %p57 = scmp.eq.s32.totalorder %s16, 0
      %p58 = por %p56, %p57
      %p59 = scmp.ne.s32.totalorder %s47, %s48
      %p60 = scmp.eq.s32.totalorder %s17, 1
      %p61 = por %p59, %p60
      %p63 = scmp.ne.s32.totalorder %s48, %s62
      %p64 = scmp.eq.s32.totalorder %s17, 0
      %p65 = por %p63, %p64
      %s67 = sadd.s32 %s66, 1
      %p70 = scmp.eq.s32.totalorder %s11, 1
      %p71 = scmp.ne.s32.totalorder %s66, %s68
      %p72 = scmp.eq.s32.totalorder %s11, 0
      %p73 = por %p71, %p72
      %p74 = scmp.ne.s32.totalorder %s66, %s68
      %p75 = scmp.eq.s32.totalorder %s16, 1
      %p76 = por %p74, %p75
      %p77 = scmp.ne.s32.totalorder %s68, %s69
      %p78 = scmp.eq.s32.totalorder %s16, 0
      %p79 = por %p77, %p78
      %p80 = scmp.ne.s32.totalorder %s68, %s69
      %p81 = scmp.eq.s32.totalorder %s17, 1
      %p82 = por %p80, %p81
      %p84 = scmp.ne.s32.totalorder %s69, %s83
      %p85 = scmp.eq.s32.totalorder %s17, 0
      %p86 = por %p84, %p85
      %s88 = sadd.s32 %s87, 1
      %p91 = scmp.eq.s32.totalorder %s11, 1
      %p92 = scmp.ne.s32.totalorder %s87, %s89
      %p93 = scmp.eq.s32.totalorder %s11, 0
      %p94 = por %p92, %p93
      %p95 = scmp.ne.s32.totalorder %s87, %s89
      %p96 = scmp.eq.s32.totalorder %s16, 1
      %p97 = por %p95, %p96
      %p98 = scmp.ne.s32.totalorder %s89, %s90
      %p99 = scmp.eq.s32.totalorder %s16, 0
      %p100 = por %p98, %p99
      %p101 = scmp.ne.s32.totalorder %s89, %s90
      %p102 = scmp.eq.s32.totalorder %s17, 1
      %p103 = por %p101, %p102
      %p105 = scmp.ne.s32.totalorder %s90, %s104
      %p106 = scmp.eq.s32.totalorder %s17, 0
      %p107 = por %p105, %p106
      %s109 = sadd.s32 %s108, 1
      %p112 = scmp.eq.s32.totalorder %s11, 1
      %p113 = scmp.ne.s32.totalorder %s108, %s110
      %p114 = scmp.eq.s32.totalorder %s11, 0
      %p115 = por %p113, %p114
      %p116 = scmp.ne.s32.totalorder %s108, %s110
      %p117 = scmp.eq.s32.totalorder %s16, 1
      %p118 = por %p116, %p117
      %p119 = scmp.ne.s32.totalorder %s110, %s111
      %p120 = scmp.eq.s32.totalorder %s16, 0
      %p121 = por %p119, %p120
      %p122 = scmp.ne.s32.totalorder %s110, %s111
      %p123 = scmp.eq.s32.totalorder %s17, 1
      %p124 = por %p122, %p123
      %p126 = scmp.ne.s32.totalorder %s111, %s125
      %p127 = scmp.eq.s32.totalorder %s17, 0
      %p128 = por %p126, %p127
      %s129 = ssub.s32 %s11, %s18
      %p130 = scmp.eq.s32.totalorder %s129, 0
      %s132 = sadd.s32 %s131, 1
      %s133 = scalar_select %p130, %s131, %s132
      %p136 = pneg %p130
      %p137 = scmp.eq.s32.totalorder %s11, 1
      %p138 = por %p136, %p137
      %p139 = scmp.ne.s32.totalorder %s131, %s134
      %p140 = scmp.eq.s32.totalorder %s11, 0
      %p141 = por %p139, %p140
      %p142 = scmp.ne.s32.totalorder %s131, %s134
      %p143 = scmp.eq.s32.totalorder %s16, 1
      %p144 = por %p142, %p143
      %p145 = scmp.ne.s32.totalorder %s134, %s135
      %p146 = scmp.eq.s32.totalorder %s16, 0
      %p147 = por %p145, %p146
      %p148 = scmp.ne.s32.totalorder %s134, %s135
      %p149 = scmp.eq.s32.totalorder %s17, 1
      %p150 = por %p148, %p149
      %p152 = scmp.ne.s32.totalorder %s135, %s151
      %p153 = scmp.eq.s32.totalorder %s17, 0
      %p154 = por %p152, %p153
      %p155 = scmp.le.s32.totalorder 1, %s11
      %p156 = scmp.lt.s32.totalorder %s11, 3
      %p157 = pnand %p155, %p156
      %p158 = pneg %p157
      // Predicated region
      $region9: #{my_mlp_forward.1} parent=5 // pred_check
        _
      $region10: #{my_mlp_forward.1} parent=5 // pred_check_branch
        %160 = sbr.rel (%p157) target = $region12
      $region11: #{my_mlp_forward.1} parent=5 // pred_region
        %s161 = ssub.s32 %s11, 1
        // Predicated region
        $region13: #{my_mlp_forward.1} parent=11 // pred_check
          %p162 = pneg %p58
        $region14: #{my_mlp_forward.1} parent=11 // pred_check_branch
          %164 = sbr.rel (%p162) target = $region16
        $region15: #{my_mlp_forward.1} parent=11 // pred_region
          _
        $region16: #{my_mlp_forward.1} parent=11 // pred_fallthru
          _
        // Predicated region
        $region17: #{my_mlp_forward.1} parent=11 // pred_check
          %p165 = pneg %p79
        $region18: #{my_mlp_forward.1} parent=11 // pred_check_branch
          %167 = sbr.rel (%p165) target = $region20
        $region19: #{my_mlp_forward.1} parent=11 // pred_region
          _
        $region20: #{my_mlp_forward.1} parent=11 // pred_fallthru
          _
        // Predicated region
        $region21: #{my_mlp_forward.1} parent=11 // pred_check
          %p168 = pneg %p100
        $region22: #{my_mlp_forward.1} parent=11 // pred_check_branch
          %170 = sbr.rel (%p168) target = $region24
        $region23: #{my_mlp_forward.1} parent=11 // pred_region
          _
        $region24: #{my_mlp_forward.1} parent=11 // pred_fallthru
          _
        // Predicated region
        $region25: #{my_mlp_forward.1} parent=11 // pred_check
          %p171 = pneg %p121
        $region26: #{my_mlp_forward.1} parent=11 // pred_check_branch
          %173 = sbr.rel (%p171) target = $region28
        $region27: #{my_mlp_forward.1} parent=11 // pred_region
          _
        $region28: #{my_mlp_forward.1} parent=11 // pred_fallthru
          _
      $region12: #{my_mlp_forward.1} parent=5 // pred_fallthru
        _
      %p174 = scmp.lt.s32.totalorder %s11, 2
      // Predicated region
      $region29: #{my_mlp_forward.1} parent=5 // pred_check
        %p175 = pneg %p174
      $region30: #{my_mlp_forward.1} parent=5 // pred_check_branch
        %177 = sbr.rel (%p175) target = $region32
      $region31: #{my_mlp_forward.1} parent=5 // pred_region
        // Predicated region
        $region33: #{my_mlp_forward.1} parent=31 // pred_check
          %p178 = pneg %p31
        $region34: #{my_mlp_forward.1} parent=31 // pred_check_branch
          %180 = sbr.rel (%p178) target = $region36
        $region35: #{my_mlp_forward.1} parent=31 // pred_region
          %s181 = smul.u32 2, %s11
          %s182 = ssub.s32 3, %s181
          %p183 = scmp.lt.s32.totalorder %s182, 2
          %s184 = scalar_select %p183, %s182, 2
          %s185 = smul.u32 8, %s184
          %s186 = smul.u32 %s185, 2
          %p187 = scmp.lt.s32.totalorder %s181, 2
          %s188 = scalar_select %p187, %s181, 2
          %s189 = smul.addr %s188, 2
          %s190 = smul.addr %s189, 8
          %s191 = scalar_lea.vmem %s0, %s190
          %s192 = smul.u32 2, %s11
          %s193 = ssub.s32 3, %s192
          %p194 = scmp.lt.s32.totalorder %s193, 2
          %s195 = scalar_select %p194, %s193, 2
          %s196 = smul.u32 8, %s195
          %s197 = smul.u32 %s196, 2
        $region36: #{my_mlp_forward.1} parent=31 // pred_fallthru
          _
      $region32: #{my_mlp_forward.1} parent=5 // pred_fallthru
        _
      %p198 = scmp.le.s32.totalorder 1, %s11
      %p199 = scmp.lt.s32.totalorder %s11, 3
      %p200 = pnand %p198, %p199
      %p201 = pneg %p200
      // Predicated region
      $region37: #{my_mlp_forward.1} parent=5 // pred_check
        _
      $region38: #{my_mlp_forward.1} parent=5 // pred_check_branch
        %203 = sbr.rel (%p200) target = $region40
      $region39: #{my_mlp_forward.1} parent=5 // pred_region
        %s204 = ssub.s32 %s11, 1
        %s205 = smul.u32 2, %s16
        %s206 = ssub.s32 3, %s205
        %p207 = scmp.lt.s32.totalorder %s206, 2
        %s208 = scalar_select %p207, %s206, 2
        %s209 = smul.u32 8, %s208
        %s210 = smul.u32 %s209, 2
        %p211 = scmp.lt.s32.totalorder %s205, 2
        %s212 = scalar_select %p211, %s205, 2
        %s213 = smul.addr %s212, 2
        %s214 = smul.addr %s213, 8
        %s215 = scalar_lea.vmem %s0, %s214
        %p216 = pneg %p37
        %p217 = pneg %p34
        %p218 = pneg %p58
        %p219 = pneg %p55
        %p220 = pneg %p79
        %p221 = pneg %p76
        %p222 = pneg %p100
        %p223 = pneg %p97
        %p224 = pneg %p121
        %p225 = pneg %p118
        %p226 = pneg %p147
        %p227 = pneg %p144
        %s228 = sand.u32 %s134, 1
        %s229 = sand.u32 %s134, 1
        %s230 = smul.addr %s229, 16
        %s231 = scalar_lea.vmem [#allocation2], %s230
        %s232 = smul.u32 2, %s16
        %s233 = ssub.s32 3, %s232
        %p234 = scmp.lt.s32.totalorder %s233, 2
        %s235 = scalar_select %p234, %s233, 2
        %s236 = smul.u32 8, %s235
        %s237 = smul.u32 %s236, 2
        %p238 = scmp.lt.s32.totalorder %s232, 2
        %s239 = scalar_select %p238, %s232, 2
        %s240 = smul.addr %s239, 2
        %s241 = smul.addr %s240, 8
        %s242 = scalar_lea.vmem %s0, %s241
        %s243 = smul.u32 2, %s16
        %s244 = ssub.s32 3, %s243
        %p245 = scmp.lt.s32.totalorder %s244, 2
        %s246 = scalar_select %p245, %s244, 2
        %s247 = smul.u32 8, %s246
        %s248 = smul.u32 %s247, 2
        %s249 = smul.u32 2, %s16
        %s250 = ssub.s32 3, %s249
        %p251 = scmp.lt.s32.totalorder %s250, 2
        %s252 = scalar_select %p251, %s250, 2
        %s253 = smul.u32 8, %s252
        %v255 = vld [vmem:[%s4] sm:$0x1]
        %v256 = vld [vmem:[%s4 + $0x1] sm:$0x1]
        %v257 = vld [vmem:[%s4 + $0x2] sm:$0x1]
        %v258 = vld [vmem:[%s242] sm:$0xff]
        %v259 = vld [vmem:[%s242 + $0x8] sm:$0xff]
        %v260 = vld [vmem:[%s242 + $0x10] sm:$0xff]
        %v261 = vld [vmem:[%s242 + $0x18] sm:$0xff]
        %v262 = vpack.c.bf16 %v260, %v258
        %v263 = vpack.c.bf16 %v261, %v259
        %v264 = vld [vmem:[%s1] sm:$0xf]
        %v265 = vld [vmem:[%s1 + $0x4] sm:$0xf]
        %v266 = vld [vmem:[%s1 + $0x8] sm:$0xf]
        %v267 = vld [vmem:[%s1 + $0xc] sm:$0xf]
        %v268 = vld [vmem:[%s1 + $0x10] sm:$0xf]
        %v269 = vld [vmem:[%s1 + $0x14] sm:$0xf]
        %v270 = vld [vmem:[%s1 + $0x18] sm:$0xf]
        %v271 = vld [vmem:[%s1 + $0x1c] sm:$0xf]
        %v272 = vld [vmem:[%s1 + $0x20] sm:$0xf]
        %v273 = vld [vmem:[%s1 + $0x24] sm:$0xf]
        %v274 = vld [vmem:[%s1 + $0x28] sm:$0xf]
        %v275 = vld [vmem:[%s1 + $0x2c] sm:$0xf]
        %v276 = vld [vmem:[%s1 + $0x30] sm:$0xf]
        %v277 = vld [vmem:[%s1 + $0x34] sm:$0xf]
        %v278 = vld [vmem:[%s1 + $0x38] sm:$0xf]
        %v279 = vld [vmem:[%s1 + $0x3c] sm:$0xf]
        %v280 = vld [vmem:[%s1 + $0x40] sm:$0xf]
        %v281 = vld [vmem:[%s1 + $0x44] sm:$0xf]
        %v282 = vld [vmem:[%s1 + $0x48] sm:$0xf]
        %v283 = vld [vmem:[%s1 + $0x4c] sm:$0xf]
        %v284 = vld [vmem:[%s1 + $0x50] sm:$0xf]
        %v285 = vld [vmem:[%s1 + $0x54] sm:$0xf]
        %v286 = vld [vmem:[%s1 + $0x58] sm:$0x1]
        %v287 = vperm.slane %v255, 0
        %v311 = vunpack.c.l.b16 %v264
        %v312 = vunpack.c.l.b16 %v265
        %v313 = vunpack.c.l.b16 %v266
        %v314 = vunpack.c.l.b16 %v267
        %v315 = vunpack.c.l.b16 %v268
        %v316 = vunpack.c.l.b16 %v269
        %v317 = vunpack.c.l.b16 %v270
        %v318 = vunpack.c.l.b16 %v271
        %v319 = vunpack.c.l.b16 %v272
        %v320 = vunpack.c.l.b16 %v273
        %v321 = vunpack.c.l.b16 %v274
        %v322 = vunpack.c.l.b16 %v275
        %v323 = vunpack.c.l.b16 %v276
        %v324 = vunpack.c.l.b16 %v277
        %v325 = vunpack.c.l.b16 %v278
        %v326 = vunpack.c.l.b16 %v279
        %v327 = vunpack.c.l.b16 %v280
        %v328 = vunpack.c.l.b16 %v281
        %v329 = vunpack.c.l.b16 %v282
        %v330 = vunpack.c.l.b16 %v283
        %v331 = vunpack.c.l.b16 %v284
        %v332 = vunpack.c.l.b16 %v285
        %v333 = vunpack.c.l.b16 %v286
        %v334 = vpack.c.b16 %v312, %v311
        %v335 = vpack.c.b16 %v314, %v313
        %v336 = vpack.c.b16 %v316, %v315
        %v337 = vpack.c.b16 %v318, %v317
        %v338 = vpack.c.b16 %v320, %v319
        %v339 = vpack.c.b16 %v322, %v321
        %v340 = vpack.c.b16 %v324, %v323
        %v341 = vpack.c.b16 %v326, %v325
        %v342 = vpack.c.b16 %v328, %v327
        %v343 = vpack.c.b16 %v330, %v329
        %v344 = vpack.c.b16 %v332, %v331
        %v345 = vpack.c.b16 %v333, %v333
        %vm357 = vcmask 408576
        %v359 = vsel %vm357, %v263, 0
        %vm361 = vcmask 1040384
        %v363 = vsel %vm361, %v345, 0
        %365 = vmatpush.bf16.msra.mxu0 %v341
        %366 = vmatpush.bf16.msra.mxu0 %v340
        %367 = vmatpush.bf16.msra.mxu0 %v339
        %368 = vmatpush.bf16.msra.mxu0 %v338
        %369 = vmatpush.bf16.msra.mxu0 %v337
        %370 = vmatpush.bf16.msra.mxu0 %v336
        %371 = vmatpush.bf16.msra.mxu0 %v335
        %372 = vmatpush.bf16.msra.mxu0 %v334
        %373 = vmatmul.bf16.gmra.mxu0 %v262
        %v374 = vpop.f32.mrf.mxu0
        %v375 = vadd.f32 %v287, %v374
        %v376 = vpop.f32.mrf.mxu0
        %v377 = vadd.f32 %v287, %v376
        %378 = vdwg.mxu0
        %379 = vmatpush.bf16.msra.mxu0 0
        %380 = vmatpush.bf16.msra.mxu0 0
        %381 = vmatpush.bf16.msra.mxu0 0
        %382 = vmatpush.bf16.msra.mxu0 0
        %383 = vmatpush.bf16.msra.mxu0 %v363
        %384 = vmatpush.bf16.msra.mxu0 %v344
        %385 = vmatpush.bf16.msra.mxu0 %v343
        %386 = vmatpush.bf16.msra.mxu0 %v342
        %387 = vmatmul.bf16.gmra.mxu0 %v359
        %v388 = vpop.f32.mrf.mxu0
        %v389 = vadd.f32 %v375, %v388
        %v390 = vpop.f32.mrf.mxu0
        %v391 = vadd.f32 %v377, %v390
        %392 = vdwg.mxu0
        %v393 = vmax.f32 %v389, 0.0
        %v394 = vmax.f32 %v391, 0.0
        %v395 = vpack.c.bf16 %v394, %v393
        %v396 = vld [vmem:[%s2] sm:$0xf]
        %v397 = vld [vmem:[%s2 + $0x4] sm:$0xf]
        %v398 = vld [vmem:[%s2 + $0x8] sm:$0xf]
        %v399 = vld [vmem:[%s2 + $0xc] sm:$0xf]
        %v400 = vld [vmem:[%s2 + $0x10] sm:$0xf]
        %v401 = vld [vmem:[%s2 + $0x14] sm:$0xf]
        %v402 = vld [vmem:[%s2 + $0x18] sm:$0xf]
        %v403 = vld [vmem:[%s2 + $0x1c] sm:$0xf]
        %v404 = vperm.slane %v256, 0
        %v413 = vunpack.c.l.b16 %v396
        %v414 = vunpack.c.l.b16 %v397
        %v415 = vunpack.c.l.b16 %v398
        %v416 = vunpack.c.l.b16 %v399
        %v417 = vunpack.c.l.b16 %v400
        %v418 = vunpack.c.l.b16 %v401
        %v419 = vunpack.c.l.b16 %v402
        %v420 = vunpack.c.l.b16 %v403
        %v421 = vpack.c.b16 %v414, %v413
        %v422 = vpack.c.b16 %v416, %v415
        %v423 = vpack.c.b16 %v418, %v417
        %v424 = vpack.c.b16 %v420, %v419
        %vm429 = vcmask 523264
        %v431 = vsel %vm429, %v395, 0
        %433 = vmatpush.bf16.msra.mxu0 0
        %434 = vmatpush.bf16.msra.mxu0 0
        %435 = vmatpush.bf16.msra.mxu0 0
        %436 = vmatpush.bf16.msra.mxu0 0
        %437 = vmatpush.bf16.msra.mxu0 %v424
        %438 = vmatpush.bf16.msra.mxu0 %v423
        %439 = vmatpush.bf16.msra.mxu0 %v422
        %440 = vmatpush.bf16.msra.mxu0 %v421
        %441 = vmatmul.bf16.gmra.mxu0 %v431
        %v442 = vpop.f32.mrf.mxu0
        %v443 = vadd.f32 %v404, %v442
        %v444 = vpop.f32.mrf.mxu0
        %v445 = vadd.f32 %v404, %v444
        %446 = vdwg.mxu0
        %v447 = vmax.f32 %v443, 0.0
        %v448 = vmax.f32 %v445, 0.0
        %v449 = vpack.c.bf16 %v448, %v447
        %v450 = vld [vmem:[%s3] sm:$0xf]
        %v451 = vld [vmem:[%s3 + $0x4] sm:$0xf]
        %v452 = vperm.slane %v257, 0
        %v455 = vunpack.c.l.b16 %v450
        %v456 = vunpack.c.l.b16 %v451
        %v457 = vpack.c.b16 %v456, %v455
        %vm459 = vcmask 130048
        %v461 = vsel %vm459, %v449, 0
        %463 = vmatpush.bf16.msra.mxu0 0
        %464 = vmatpush.bf16.msra.mxu0 0
        %465 = vmatpush.bf16.msra.mxu0 0
        %466 = vmatpush.bf16.msra.mxu0 0
        %467 = vmatpush.bf16.msra.mxu0 0
        %468 = vmatpush.bf16.msra.mxu0 0
        %469 = vmatpush.bf16.msra.mxu0 0
        %470 = vmatpush.bf16.msra.mxu0 %v457
        %471 = vmatmul.bf16.gmra.mxu0 %v461
        %v472 = vpop.f32.mrf.mxu0
        %v473 = vadd.f32 %v452, %v472
        %v474 = vpop.f32.mrf.mxu0
        %v475 = vadd.f32 %v452, %v474
        %476 = vdwg.mxu0
        %vm477 = vcmask 39936
        %478 = vst.msk [vmem:[%s231] sm:$0xff] %vm477, %v473
        %479 = vst.msk [vmem:[%s231 + $0x8] sm:$0xff] %vm477, %v475
        %s480 = sand.u32 %s134, 1
        %s481 = sand.u32 %s134, 1
        %s482 = smul.addr %s481, 16
        %s483 = scalar_lea.vmem [#allocation2], %s482
        // Predicated region
        $region41: #{my_mlp_forward.1} parent=39 // pred_check
          %p484 = pneg %p144
        $region42: #{my_mlp_forward.1} parent=39 // pred_check_branch
          %486 = sbr.rel (%p484) target = $region44
        $region43: #{my_mlp_forward.1} parent=39 // pred_region
          %s487 = smul.u32 2, %s16
          %s488 = ssub.s32 3, %s487
          %p489 = scmp.lt.s32.totalorder %s488, 2
          %s490 = scalar_select %p489, %s488, 2
          %s491 = smul.u32 8, %s490
          %p492 = scmp.ne.s32.totalorder 0, %s491
          %s493 = smul.addr %s487, 8
          %s494 = scalar_lea.vmem %s5, %s493
          // Predicated region
          $region45: #{my_mlp_forward.1} parent=43 // pred_check
            %p495 = pneg %p492
          $region46: #{my_mlp_forward.1} parent=43 // pred_check_branch
            %497 = sbr.rel (%p495) target = $region48
          $region47: #{my_mlp_forward.1} parent=43 // pred_region
            // Predicated region
            $region49: #{my_mlp_forward.1} parent=47 // pred_check
              _
            $region50: #{my_mlp_forward.1} parent=47 // pred_check_branch
              %499 = sbr.rel (0) target = $region52
            $region51: #{my_mlp_forward.1} parent=47 // pred_region
              // Predicated region
              $region71: #{my_mlp_forward.1} parent=51 // pred_check
                _
              $region72: #{my_mlp_forward.1} parent=51 // pred_check_branch
                %551 = sbr.rel (0) target = $region74
              $region73: #{my_mlp_forward.1} parent=51 // pred_region
                %s552 = sshrl.u32 %s490, 1
                // While loop
                $region75: #{my_mlp_forward.1} parent=73 // loop_pre_header
                  _
                $region76: #{my_mlp_forward.1} parent=73 // loop_header
                  %s554 = sphi 0, %s556
                  %p555 = scmp.ge.s32.totalorder %s554, %s552
                  %s559 = sphi 0, %s568
                  %s560 = sphi %s483, %s571
                  %s561 = sphi %s494, %s572
                $region77: #{my_mlp_forward.1} parent=73 // loop_header_branch
                  %558 = sbr.rel (%p555) target = $region81
                $region78: #{my_mlp_forward.1} parent=73 // loop_body
                  %v562 = vld [vmem:[%s560] sm:$0xff]
                  %563 = vst [vmem:[%s561] sm:$0xff] %v562
                  %v564 = vld [vmem:[%s560 + $0x8] sm:$0xff]
                  %565 = vst [vmem:[%s561 + $0x8] sm:$0xff] %v564
                  %s566 = sadd.s32 1, %s559
                  %p567 = scmp.ge.s32.totalorder %s566, %s552
                  %s568 = scalar_select %p567, 0, %s566
                  %s569 = smul.u32 %s568, 16
                  %s570 = smul.u32 %s568, 16
                  %s571 = scalar_lea.vmem %s483, %s569 [#allocation2]
                  %s572 = scalar_lea.vmem %s494, %s570
                $region79: #{my_mlp_forward.1} parent=73 // loop_footer
                  %s556 = sadd.s32 %s554, 1
                $region80: #{my_mlp_forward.1} parent=73 // loop_footer_branch
                  %553 = sbr.rel target = $region76
                $region81: #{my_mlp_forward.1} parent=73 // loop_exit
                  _
                %s573 = sshrl.u32 %s490, 1
                %s574 = sand.u32 %s490, 1
                %s575 = smul.u32 %s573, 2
                %s576 = smul.u32 8, %s575
                %s577 = scalar_lea.vmem %s483, %s576 [#allocation2]
                %s578 = smul.u32 8, %s575
                %s579 = scalar_lea.vmem %s494, %s578
                // While loop
                $region82: #{my_mlp_forward.1} parent=73 // loop_pre_header
                  _
                $region83: #{my_mlp_forward.1} parent=73 // loop_header
                  %s581 = sphi 0, %s583
                  %p582 = scmp.ge.s32.totalorder %s581, %s574
                  %s586 = sphi 0, %s593
                  %s587 = sphi %s577, %s596
                  %s588 = sphi %s579, %s597
                $region84: #{my_mlp_forward.1} parent=73 // loop_header_branch
                  %585 = sbr.rel (%p582) target = $region88
                $region85: #{my_mlp_forward.1} parent=73 // loop_body
                  %v589 = vld [vmem:[%s587] sm:$0xff]
                  %590 = vst [vmem:[%s588] sm:$0xff] %v589
                  %s591 = sadd.s32 1, %s586
                  %p592 = scmp.ge.s32.totalorder %s591, %s574
                  %s593 = scalar_select %p592, 0, %s591
                  %s594 = smul.u32 %s593, 8
                  %s595 = smul.u32 %s593, 8
                  %s596 = scalar_lea.vmem %s577, %s594 [#allocation2]
                  %s597 = scalar_lea.vmem %s579, %s595
                $region86: #{my_mlp_forward.1} parent=73 // loop_footer
                  %s583 = sadd.s32 %s581, 1
                $region87: #{my_mlp_forward.1} parent=73 // loop_footer_branch
                  %580 = sbr.rel target = $region83
                $region88: #{my_mlp_forward.1} parent=73 // loop_exit
                  _
              $region74: #{my_mlp_forward.1} parent=51 // pred_fallthru
                _
              // Predicated region
              $region89: #{my_mlp_forward.1} parent=51 // pred_check
                _
              $region90: #{my_mlp_forward.1} parent=51 // pred_check_branch
                %599 = sbr.rel target = $region92
              $region91: #{my_mlp_forward.1} parent=51 // pred_region
                _
              $region92: #{my_mlp_forward.1} parent=51 // pred_fallthru
                _
            $region52: #{my_mlp_forward.1} parent=47 // pred_fallthru
              _
            // Predicated region
            $region53: #{my_mlp_forward.1} parent=47 // pred_check
              _
            $region54: #{my_mlp_forward.1} parent=47 // pred_check_branch
              %501 = sbr.rel target = $region56
            $region55: #{my_mlp_forward.1} parent=47 // pred_region
              %s503 = ssub.s32 256, 1
              %s504 = sshrl.u32 %s490, 1
              // While loop
              $region57: #{my_mlp_forward.1} parent=55 // loop_pre_header
                _
              $region58: #{my_mlp_forward.1} parent=55 // loop_header
                %s506 = sphi 0, %s508
                %p507 = scmp.ge.s32.totalorder %s506, %s504
                %s511 = sphi 0, %s520
                %s512 = sphi %s483, %s523
                %s513 = sphi %s494, %s524
              $region59: #{my_mlp_forward.1} parent=55 // loop_header_branch
                %510 = sbr.rel (%p507) target = $region63
              $region60: #{my_mlp_forward.1} parent=55 // loop_body
                %v514 = vld [vmem:[%s512] sm:%s503]
                %515 = vst [vmem:[%s513] sm:%s503] %v514
                %v516 = vld [vmem:[%s512 + $0x8] sm:%s503]
                %517 = vst [vmem:[%s513 + $0x8] sm:%s503] %v516
                %s518 = sadd.s32 1, %s511
                %p519 = scmp.ge.s32.totalorder %s518, %s504
                %s520 = scalar_select %p519, 0, %s518
                %s521 = smul.u32 %s520, 16
                %s522 = smul.u32 %s520, 16
                %s523 = scalar_lea.vmem %s483, %s521 [#allocation2]
                %s524 = scalar_lea.vmem %s494, %s522
              $region61: #{my_mlp_forward.1} parent=55 // loop_footer
                %s508 = sadd.s32 %s506, 1
              $region62: #{my_mlp_forward.1} parent=55 // loop_footer_branch
                %505 = sbr.rel target = $region58
              $region63: #{my_mlp_forward.1} parent=55 // loop_exit
                _
              %s525 = sshrl.u32 %s490, 1
              %s526 = sand.u32 %s490, 1
              %s527 = smul.u32 %s525, 2
              %s528 = smul.u32 8, %s527
              %s529 = scalar_lea.vmem %s483, %s528 [#allocation2]
              %s530 = smul.u32 8, %s527
              %s531 = scalar_lea.vmem %s494, %s530
              // While loop
              $region64: #{my_mlp_forward.1} parent=55 // loop_pre_header
                _
              $region65: #{my_mlp_forward.1} parent=55 // loop_header
                %s533 = sphi 0, %s535
                %p534 = scmp.ge.s32.totalorder %s533, %s526
                %s538 = sphi 0, %s545
                %s539 = sphi %s529, %s548
                %s540 = sphi %s531, %s549
              $region66: #{my_mlp_forward.1} parent=55 // loop_header_branch
                %537 = sbr.rel (%p534) target = $region70
              $region67: #{my_mlp_forward.1} parent=55 // loop_body
                %v541 = vld [vmem:[%s539] sm:%s503]
                %542 = vst [vmem:[%s540] sm:%s503] %v541
                %s543 = sadd.s32 1, %s538
                %p544 = scmp.ge.s32.totalorder %s543, %s526
                %s545 = scalar_select %p544, 0, %s543
                %s546 = smul.u32 %s545, 8
                %s547 = smul.u32 %s545, 8
                %s548 = scalar_lea.vmem %s529, %s546 [#allocation2]
                %s549 = scalar_lea.vmem %s531, %s547
              $region68: #{my_mlp_forward.1} parent=55 // loop_footer
                %s535 = sadd.s32 %s533, 1
              $region69: #{my_mlp_forward.1} parent=55 // loop_footer_branch
                %532 = sbr.rel target = $region65
              $region70: #{my_mlp_forward.1} parent=55 // loop_exit
                _
            $region56: #{my_mlp_forward.1} parent=47 // pred_fallthru
              _
          $region48: #{my_mlp_forward.1} parent=43 // pred_fallthru
            _
          %600 = vnop
        $region44: #{my_mlp_forward.1} parent=39 // pred_fallthru
          _
      $region40: #{my_mlp_forward.1} parent=5 // pred_fallthru
        _
      %p601 = scmp.le.s32.totalorder 2, %s11
      // Predicated region
      $region93: #{my_mlp_forward.1} parent=5 // pred_check
        %p602 = pneg %p601
      $region94: #{my_mlp_forward.1} parent=5 // pred_check_branch
        %604 = sbr.rel (%p602) target = $region96
      $region95: #{my_mlp_forward.1} parent=5 // pred_region
        %s605 = ssub.s32 %s11, 2
        // Predicated region
        $region97: #{my_mlp_forward.1} parent=95 // pred_check
          %p606 = pneg %p150
        $region98: #{my_mlp_forward.1} parent=95 // pred_check_branch
          %608 = sbr.rel (%p606) target = $region100
        $region99: #{my_mlp_forward.1} parent=95 // pred_region
          %s609 = sand.u32 %s135, 1
          %s610 = sand.u32 %s135, 1
          %s611 = smul.addr %s610, 16
          %s612 = scalar_lea.vmem [#allocation2], %s611
        $region100: #{my_mlp_forward.1} parent=95 // pred_fallthru
          _
      $region96: #{my_mlp_forward.1} parent=5 // pred_fallthru
        _
    $region6: #{my_mlp_forward.1} parent=1 // loop_footer
      %s15 = sadd.s32 1, %s11
    $region7: #{my_mlp_forward.1} parent=1 // loop_footer_branch
      %10 = sbr.rel target = $region3
    $region8: #{my_mlp_forward.1} parent=1 // loop_exit
      _

</llo_original>
